<compile_context>
chip_gen: v7x
topology: tpu7x:2x2x1
jax: 0.10.0
libtpu: 0.0.40
codegen_flags: <defaults>
</compile_context>

<pallas_src>
import functools
import math

import jax
import jax.numpy as jnp
from jax import lax
from jax.experimental import pallas as pl
from jax.experimental.pallas import tpu as pltpu

PRIOR_MU = 0.0
PRIOR_SIGMA = 0.1
LOG2PI = math.log(2.0 * math.pi)


def _round_up(x, m):
    return ((x + m - 1) // m) * m


def _pick_tile(dim, candidates, fits=lambda t: True):
    """Largest candidate dividing `dim` that satisfies `fits`; else the smallest divisor."""
    divisors = [t for t in candidates if dim % t == 0]
    for t in divisors:
        if fits(t):
            return t
    return divisors[-1] if divisors else dim


@functools.lru_cache(maxsize=None)
def _vmem_caps():
    """(scoped vmem limit, double-buffered tile working-set budget) in bytes."""
    phys = 64 * 1024 * 1024  # conservative default = v7x per-TensorCore VMEM
    try:
        phys = int(pltpu.get_tpu_info().vmem_capacity_bytes)
    except Exception:
        pass
    limit = min(phys * 3 // 4, 96 * 1024 * 1024)    # v7x: 48 MiB, v5e/v6e: 96 MiB
    budget = min(phys * 2 // 5, 64 * 1024 * 1024)   # v7x: ~25 MiB, v5e/v6e: ~51 MiB
    return limit, budget


def _pad2(a, rows, cols):
    return jnp.pad(a, ((0, rows - a.shape[0]), (0, cols - a.shape[1])))


# --------------------------------------------------------------------------
# Kernel 1: weight/bias sampling + log-likelihood reductions (fp32, gridded)
# --------------------------------------------------------------------------
def sample_loglike_kernel(wmu_ref, wp_ref, weps_ref, bmu_ref, bp_ref, beps_ref,
                          w_bf16_ref, b_out_ref, lqw_ref, lpw_ref,
                          *, n_out, kd, tc):
    i = pl.program_id(0)

    def softplus_thr20(x):
        # F.softplus(x, beta=1, threshold=20)
        return jnp.where(x > 20.0, x, jnp.log1p(jnp.exp(jnp.minimum(x, 20.0))))

    def sample_and_loglike(mu, p, eps):
        std = 1e-6 + softplus_thr20(p)
        w = mu + std * eps
        # (w - mu)/std is algebraically exactly eps -> no divide needed.
        lq = -0.5 * LOG2PI - jnp.log(std) - 0.5 * eps * eps
        pin = (w - PRIOR_MU) * (1.0 / PRIOR_SIGMA)
        lp = (-0.5 * LOG2PI - math.log(PRIOR_SIGMA)) - 0.5 * pin * pin
        return w, lq, lp

    # ---- weight tile (TC1, Kp); zero-padded entries sample to exactly 0 ----
    w, lq_w, lp_w = sample_and_loglike(wmu_ref[...], wp_ref[...], weps_ref[...])
    rows = lax.broadcasted_iota(jnp.int32, w.shape, 0) + i * tc
    cols = lax.broadcasted_iota(jnp.int32, w.shape, 1)
    valid = (rows < n_out) & (cols < kd)
    lqw_tile = jnp.sum(jnp.where(valid, lq_w, 0.0))
    lpw_tile = jnp.sum(jnp.where(valid, lp_w, 0.0))

    w_bf16_ref[...] = w.astype(jnp.bfloat16)     # matmul-ready bf16 weight tile

    @pl.when(i == 0)
    def _():
        # ---- bias (done once; value lives in lane 0 of the (Cp, 128) slab) ----
        b, lq_b, lp_b = sample_and_loglike(bmu_ref[...], bp_ref[...], beps_ref[...])
        rb = lax.broadcasted_iota(jnp.int32, b.shape, 0)
        cb = lax.broadcasted_iota(jnp.int32, b.shape, 1)
        bvalid = (rb < n_out) & (cb == 0)
        b_out_ref[...] = jnp.where(bvalid, b, 0.0)
        lqw_ref[0, 0] = jnp.sum(jnp.where(bvalid, lq_b, 0.0))
        lpw_ref[0, 0] = jnp.sum(jnp.where(bvalid, lp_b, 0.0))

    # scalar accumulators live in SMEM and persist across the Cout-tile grid
    lqw_ref[0, 0] += lqw_tile
    lpw_ref[0, 0] += lpw_tile


# --------------------------------------------------------------------------
# Kernel 2: conv as matmul   out[n] = W @ patches[n] + b
# --------------------------------------------------------------------------
def conv_matmul_kernel(w_ref, p_ref, b_ref, o_ref):
    # single K tile: no accumulator scratch, no init/finalize
    o_ref[...] = (jnp.dot(w_ref[...], p_ref[...],
                          preferred_element_type=jnp.float32)
                  + b_ref[...][:, :1])


def conv_matmul_acc_kernel(w_ref, p_ref, b_ref, o_ref, acc_ref):
    k = pl.program_id(3)

    @pl.when(k == 0)
    def _():
        acc_ref[...] = jnp.zeros_like(acc_ref)

    acc_ref[...] += jnp.dot(w_ref[...], p_ref[...],
                            preferred_element_type=jnp.float32)

    @pl.when(k == pl.num_programs(3) - 1)
    def _():
        # bias: lane 0 of the (TCO, 128) slab, broadcast along the HW lanes
        o_ref[...] = acc_ref[...] + b_ref[...][:, :1]


# --------------------------------------------------------------------------
# XLA-side prep: bf16 im2col in per-image (N, Cin*K*K, Ho*Wo) layout
# --------------------------------------------------------------------------
def im2col_nkm(x_bf16, K, stride, padding, dilation):
    n, c, h, w = x_bf16.shape
    ho = (h + 2 * padding - dilation * (K - 1) - 1) // stride + 1
    wo = (w + 2 * padding - dilation * (K - 1) - 1) // stride + 1
    xp = jnp.pad(x_bf16, ((0, 0), (0, 0), (padding, padding), (padding, padding)))
    cols = []
    for ky in range(K):
        for kx in range(K):
            sl = xp[:, :,
                    ky * dilation: ky * dilation + (ho - 1) * stride + 1: stride,
                    kx * dilation: kx * dilation + (wo - 1) * stride + 1: stride]
            cols.append(sl)                          # (N, C, Ho, Wo)
    pat = jnp.stack(cols, axis=2)                    # (N, C, K*K, Ho, Wo)
    pat = pat.reshape(n, c * K * K, ho * wo)         # (N, Cin*K*K, Ho*Wo) — matches W's (ci,ky,kx) flatten
    return pat, ho, wo


# --------------------------------------------------------------------------
# Forward wrapper
# --------------------------------------------------------------------------
@functools.partial(jax.jit, static_argnames=("stride", "padding", "dilation"))
def bayes_conv_forward(X, W_mu, W_p, b_mu, b_p, eps_W, eps_b,
                       stride=1, padding=0, dilation=1):
    """Sampling branch of BayesConv_Normalq.forward. Returns (output, lqw, lpw)."""
    Cout, Cin, K, _ = W_mu.shape
    N = X.shape[0]
    Kd = Cin * K * K

    vmem_limit, vmem_budget = _vmem_caps()

    Cp = _round_up(Cout, 16)        # bf16 sublane-pack safe
    Kp = _round_up(Kd, 128)

    # ---- bf16 im2col at padded shape (single bf16 HBM materialization) ----
    patches, Ho, Wo = im2col_nkm(X.astype(jnp.bfloat16), K, stride, padding, dilation)
    HW = Ho * Wo
    HWp = _round_up(HW, 128)
    patches_pad = jnp.pad(patches, ((0, 0), (0, Kp - Kd), (0, HWp - HW)))

    # ---- kernel 1 inputs: padded (Cp, Kp) fp32 weights, (Cp, 128) bias slabs ----
    wmu2 = _pad2(W_mu.reshape(Cout, Kd).astype(jnp.float32), Cp, Kp)
    wp2 = _pad2(W_p.reshape(Cout, Kd).astype(jnp.float32), Cp, Kp)
    weps2 = _pad2(eps_W.reshape(Cout, Kd).astype(jnp.float32), Cp, Kp)

    def bias_slab(a):
        return _pad2(a.reshape(Cout, 1).astype(jnp.float32), Cp, 128)

    bmu2, bp2, beps2 = bias_slab(b_mu), bias_slab(b_p), bias_slab(eps_b)

    # ---- kernel 1: sampling + log-likelihoods (gridded over Cout tiles) ----
    def k1_bytes(t):
        # 3 fp32 weight inputs + bf16 weight output, double-buffered, + bias slabs
        return 2 * (3 * t * Kp * 4 + t * Kp * 2 + 4 * Cp * 128 * 4)

    TC1 = _pick_tile(Cp, (512, 256, 128, 64, 32, 16),
                     fits=lambda t: k1_bytes(t) <= vmem_budget)

    kernel1 = functools.partial(sample_loglike_kernel, n_out=Cout, kd=Kd, tc=TC1)
    W_bf16, b_slab, lqw, lpw = pl.pallas_call(
        kernel1,
        out_shape=(jax.ShapeDtypeStruct((Cp, Kp), jnp.bfloat16),
                   jax.ShapeDtypeStruct((Cp, 128), jnp.float32),
                   jax.ShapeDtypeStruct((1, 1), jnp.float32),
                   jax.ShapeDtypeStruct((1, 1), jnp.float32)),
        grid_spec=pltpu.PrefetchScalarGridSpec(
            num_scalar_prefetch=0,
            grid=(Cp // TC1,),
            in_specs=[pl.BlockSpec((TC1, Kp), lambda i: (i, 0)),
                      pl.BlockSpec((TC1, Kp), lambda i: (i, 0)),
                      pl.BlockSpec((TC1, Kp), lambda i: (i, 0)),
                      pl.BlockSpec((Cp, 128), lambda i: (0, 0)),
                      pl.BlockSpec((Cp, 128), lambda i: (0, 0)),
                      pl.BlockSpec((Cp, 128), lambda i: (0, 0))],
            out_specs=(pl.BlockSpec((TC1, Kp), lambda i: (i, 0)),
                       pl.BlockSpec((Cp, 128), lambda i: (0, 0)),
                       pl.BlockSpec((1, 1), lambda i: (0, 0),
                                    memory_space=pltpu.MemorySpace.SMEM),
                       pl.BlockSpec((1, 1), lambda i: (0, 0),
                                    memory_space=pltpu.MemorySpace.SMEM))),
        compiler_params=pltpu.CompilerParams(
            dimension_semantics=("arbitrary",),     # lqw/lpw accumulate across the grid
            vmem_limit_bytes=vmem_limit),
    )(wmu2, wp2, weps2, bmu2, bp2, beps2)

    # ---- kernel 2: gridded conv matmul (bf16 MXU inputs, fp32 accumulation) ----
    TCO = _pick_tile(Cp, (256, 128, 64, 32, 16))

    def k2_bytes(tk, tm):
        buf = 2 * (TCO * tk * 2 + tk * tm * 2 + TCO * 128 * 4 + TCO * tm * 4)
        if tk < Kp:
            buf += TCO * tm * 4   # fp32 accumulator scratch
        return buf

    TK = _pick_tile(Kp, (2048, 1024, 512, 256, 128),
                    fits=lambda t: k2_bytes(t, 128) <= vmem_budget)
    TM = _pick_tile(HWp, (2048, 1024, 512, 256, 128),
                    fits=lambda t: k2_bytes(TK, t) <= vmem_budget)

    multi_k = TK < Kp
    if multi_k:
        grid = (N, Cp // TCO, HWp // TM, Kp // TK)
        in_specs = [pl.BlockSpec((TCO, TK), lambda n, i, j, k: (i, k)),
                    pl.BlockSpec((None, TK, TM), lambda n, i, j, k: (n, k, j)),
                    pl.BlockSpec((TCO, 128), lambda n, i, j, k: (i, 0))]
        out_specs = pl.BlockSpec((None, TCO, TM), lambda n, i, j, k: (n, i, j))
        scratch = [pltpu.VMEM((TCO, TM), jnp.float32)]
        kern = conv_matmul_acc_kernel
        dims = ("parallel", "parallel", "parallel", "arbitrary")
    else:
        grid = (N, Cp // TCO, HWp // TM)
        in_specs = [pl.BlockSpec((TCO, Kp), lambda n, i, j: (i, 0)),
                    pl.BlockSpec((None, Kp, TM), lambda n, i, j: (n, 0, j)),
                    pl.BlockSpec((TCO, 128), lambda n, i, j: (i, 0))]
        out_specs = pl.BlockSpec((None, TCO, TM), lambda n, i, j: (n, i, j))
        scratch = []
        kern = conv_matmul_kernel
        dims = ("parallel", "parallel", "parallel")

    out_pad = pl.pallas_call(
        kern,
        out_shape=jax.ShapeDtypeStruct((N, Cp, HWp), jnp.float32),
        grid_spec=pltpu.PrefetchScalarGridSpec(
            num_scalar_prefetch=0,
            grid=grid,
            in_specs=in_specs,
            out_specs=out_specs,
            scratch_shapes=scratch),
        compiler_params=pltpu.CompilerParams(
            dimension_semantics=dims,
            vmem_limit_bytes=vmem_limit),
    )(W_bf16, patches_pad, b_slab)

    # output already in (N, Cout, Ho*Wo) order -> only a cheap slice + reshape
    out = out_pad[:, :Cout, :HW].reshape(N, Cout, Ho, Wo)
    return out, lqw[0, 0], lpw[0, 0]


# --------------------------------------------------------------------------
# Reference (plain JAX, fp32) for validation
# --------------------------------------------------------------------------
def _iso_gauss_loglike(x, mu, sigma):
    return jnp.sum(-0.5 * LOG2PI - jnp.log(sigma) - 0.5 * ((x - mu) / sigma) ** 2)


def reference_forward(X, W_mu, W_p, b_mu, b_p, eps_W, eps_b,
                      stride, padding, dilation):
    std_w = 1e-6 + jax.nn.softplus(W_p)
    std_b = 1e-6 + jax.nn.softplus(b_p)
    W = W_mu + std_w * eps_W
    b = b_mu + std_b * eps_b
    out = lax.conv_general_dilated(
        X, W, window_strides=(stride, stride),
        padding=[(padding, padding), (padding, padding)],
        rhs_dilation=(dilation, dilation),
        dimension_numbers=("NCHW", "OIHW", "NCHW")) + b
    lqw = _iso_gauss_loglike(W, W_mu, std_w) + _iso_gauss_loglike(b, b_mu, std_b)
    lpw = (_iso_gauss_loglike(W, PRIOR_MU, jnp.full_like(W, PRIOR_SIGMA))
           + _iso_gauss_loglike(b, PRIOR_MU, jnp.full_like(b, PRIOR_SIGMA)))
    return out, lqw, lpw


def _check(X, W_mu, W_p, b_mu, b_p, eps_W, eps_b, stride, padding, dilation):
    out, lqw, lpw = bayes_conv_forward(
        X, W_mu, W_p, b_mu, b_p, eps_W, eps_b,
        stride=stride, padding=padding, dilation=dilation)
    out, lqw, lpw = jax.block_until_ready((out, lqw, lpw))
    out_ref, lqw_ref, lpw_ref = reference_forward(
        X, W_mu, W_p, b_mu, b_p, eps_W, eps_b, stride, padding, dilation)
    # conv path uses bf16 MXU inputs (fp32 accumulation) -> looser tolerance vs fp32 ref
    assert out.shape == out_ref.shape
    assert jnp.allclose(out, out_ref, atol=5e-2, rtol=5e-2)
    # lqw / lpw are computed entirely in fp32 -> tight tolerance
    assert jnp.allclose(lqw, lqw_ref, atol=1e-3, rtol=1e-4)
    assert jnp.allclose(lpw, lpw_ref, atol=1e-3, rtol=1e-4)
    return out


# --------------------------------------------------------------------------
if __name__ == "__main__":
    # module config (small, consistent with a 3x3 conv, padding=1)
    N, Cin, H, Wsp = 2, 4, 16, 16
    Cout, K = 8, 3
    stride, padding, dilation = 1, 1, 1

    key = jax.random.PRNGKey(0)
    k = jax.random.split(key, 7)
    # deterministic parameter init matching __init__ distributions
    W_mu = jax.random.uniform(k[0], (Cout, Cin, K, K), jnp.float32, -0.1, 0.1)
    W_p = jax.random.uniform(k[1], (Cout, Cin, K, K), jnp.float32, -3.0, -2.0)
    b_mu = jax.random.uniform(k[2], (1, Cout, 1, 1), jnp.float32, -0.1, 0.1)
    b_p = jax.random.uniform(k[3], (1, Cout, 1, 1), jnp.float32, -3.0, -2.0)
    # reparameterisation noise (forward's eps_W / eps_b)
    eps_W = jax.random.normal(k[4], (Cout, Cin, K, K), jnp.float32)
    eps_b = jax.random.normal(k[5], (1, Cout, 1, 1), jnp.float32)
    # input
    X = jax.random.normal(k[6], (N, Cin, H, Wsp), jnp.float32)

    out = _check(X, W_mu, W_p, b_mu, b_p, eps_W, eps_b, stride, padding, dilation)
    assert out.shape == (N, Cout, H, Wsp)

    # second small config: exercises the K-reduction grid path (Cin*K*K > one lane tile)
    Cin2, H2, W2 = 32, 8, 8
    k2 = jax.random.split(k[6], 7)
    W_mu2 = jax.random.uniform(k2[0], (Cout, Cin2, K, K), jnp.float32, -0.1, 0.1)
    W_p2 = jax.random.uniform(k2[1], (Cout, Cin2, K, K), jnp.float32, -3.0, -2.0)
    b_mu2 = jax.random.uniform(k2[2], (1, Cout, 1, 1), jnp.float32, -0.1, 0.1)
    b_p2 = jax.random.uniform(k2[3], (1, Cout, 1, 1), jnp.float32, -3.0, -2.0)
    eps_W2 = jax.random.normal(k2[4], (Cout, Cin2, K, K), jnp.float32)
    eps_b2 = jax.random.normal(k2[5], (1, Cout, 1, 1), jnp.float32)
    X2 = jax.random.normal(k2[6], (N, Cin2, H2, W2), jnp.float32)
    _check(X2, W_mu2, W_p2, b_mu2, b_p2, eps_W2, eps_b2, stride, padding, dilation)

    print("KERNEL_OK")
</pallas_src>

<mosaic_0001>
module attributes {stable_mosaic.version = 11 : i64} {
  func.func @conv_matmul_kernel(%arg0: i32, %arg1: i32, %arg2: i32, %arg3: memref<16x128xbf16, #tpu.memory_space<vmem>>, %arg4: memref<1x128x256xbf16, #tpu.memory_space<vmem>>, %arg5: memref<16x128xf32, #tpu.memory_space<vmem>>, %arg6: memref<1x16x256xf32, #tpu.memory_space<vmem>>) attributes {dimension_semantics = [#tpu.dimension_semantics<parallel>, #tpu.dimension_semantics<parallel>, #tpu.dimension_semantics<parallel>], iteration_bounds = array<i64: 2, 1, 1>, scalar_prefetch = 0 : i64, scratch_operands = 0 : i64, tpu.core_type = #tpu.core_type<tc>, window_params = [{transform_indices = @transform_0, window_bounds = array<i64: 16, 128>}, {transform_indices = @transform_1, window_bounds = array<i64: 1, 128, 256>}, {transform_indices = @transform_2, window_bounds = array<i64: 16, 128>}, {transform_indices = @transform_3, window_bounds = array<i64: 1, 16, 256>}]} {
    %c0 = arith.constant 0 : index
    %c0_0 = arith.constant 0 : index
    %0 = vector.load %arg3[%c0, %c0_0] : memref<16x128xbf16, #tpu.memory_space<vmem>>, vector<16x128xbf16>
    %c0_1 = arith.constant 0 : index
    %c0_2 = arith.constant 0 : index
    %c0_3 = arith.constant 0 : index
    %1 = vector.load %arg4[%c0_1, %c0_2, %c0_3] : memref<1x128x256xbf16, #tpu.memory_space<vmem>>, vector<1x128x256xbf16>
    %2 = vector.shape_cast %1 : vector<1x128x256xbf16> to vector<128x256xbf16>
    %cst = arith.constant dense<0.000000e+00> : vector<16x256xf32>
    %3 = tpu.matmul %0, %2, %cst {dimension_numbers = #tpu.dot_dimension_numbers<[1], [0], [0], [1], [0, 0, 1, 1], [], []>} : vector<16x128xbf16>, vector<128x256xbf16>, vector<16x256xf32> -> vector<16x256xf32>
    %c0_4 = arith.constant 0 : index
    %c0_5 = arith.constant 0 : index
    %4 = vector.load %arg5[%c0_4, %c0_5] : memref<16x128xf32, #tpu.memory_space<vmem>>, vector<16x128xf32>
    %5 = vector.extract_strided_slice %4 {offsets = [0, 0], sizes = [16, 1], strides = [1, 1]} : vector<16x128xf32> to vector<16x1xf32>
    %6 = vector.broadcast %5 : vector<16x1xf32> to vector<16x256xf32>
    %7 = arith.addf %3, %6 : vector<16x256xf32>
    %c0_6 = arith.constant 0 : index
    %c0_7 = arith.constant 0 : index
    %c0_8 = arith.constant 0 : index
    %8 = vector.load %arg6[%c0_6, %c0_7, %c0_8] : memref<1x16x256xf32, #tpu.memory_space<vmem>>, vector<1x16x256xf32>
    %9 = vector.shape_cast %8 : vector<1x16x256xf32> to vector<16x256xf32>
    %10 = vector.shape_cast %7 : vector<16x256xf32> to vector<1x16x256xf32>
    tpu.vector_store %arg6[%c0_6, %c0_7, %c0_8], %10 {strides = array<i32>} : memref<1x16x256xf32, #tpu.memory_space<vmem>>, vector<1x16x256xf32>,
    return
  }
  func.func @transform_0(%arg0: i32, %arg1: i32, %arg2: i32) -> (i32, i32) {
    %c0_i32 = arith.constant 0 : i32
    %c0_i32_0 = arith.constant 0 : i32
    return %arg1, %c0_i32 : i32, i32
  }
  func.func @transform_1(%arg0: i32, %arg1: i32, %arg2: i32) -> (i32, i32, i32) {
    %c0_i32 = arith.constant 0 : i32
    %c0_i32_0 = arith.constant 0 : i32
    return %arg0, %c0_i32, %arg2 : i32, i32, i32
  }
  func.func @transform_2(%arg0: i32, %arg1: i32, %arg2: i32) -> (i32, i32) {
    %c0_i32 = arith.constant 0 : i32
    %c0_i32_0 = arith.constant 0 : i32
    return %arg1, %c0_i32 : i32, i32
  }
  func.func @transform_3(%arg0: i32, %arg1: i32, %arg2: i32) -> (i32, i32, i32) {
    %c0_i32 = arith.constant 0 : i32
    return %arg0, %arg1, %arg2 : i32, i32, i32
  }
}

module attributes {stable_mosaic.version = 11 : i64} {
  func.func @sample_loglike_kernel(%arg0: i32, %arg1: memref<16x128xf32, #tpu.memory_space<vmem>>, %arg2: memref<16x128xf32, #tpu.memory_space<vmem>>, %arg3: memref<16x128xf32, #tpu.memory_space<vmem>>, %arg4: memref<16x128xf32, #tpu.memory_space<vmem>>, %arg5: memref<16x128xf32, #tpu.memory_space<vmem>>, %arg6: memref<16x128xf32, #tpu.memory_space<vmem>>, %arg7: memref<16x128xbf16, #tpu.memory_space<vmem>>, %arg8: memref<16x128xf32, #tpu.memory_space<vmem>>, %arg9: memref<1x1xf32, #tpu.memory_space<smem>>, %arg10: memref<1x1xf32, #tpu.memory_space<smem>>) attributes {dimension_semantics = [#tpu.dimension_semantics<arbitrary>], iteration_bounds = array<i64: 1>, scalar_prefetch = 0 : i64, scratch_operands = 0 : i64, tpu.core_type = #tpu.core_type<tc>, window_params = [{transform_indices = @transform_0, window_bounds = array<i64: 16, 128>}, {transform_indices = @transform_1, window_bounds = array<i64: 16, 128>}, {transform_indices = @transform_2, window_bounds = array<i64: 16, 128>}, {pipeline_mode = #tpu.pipeline_mode<synchronous>, transform_indices = @transform_3, window_bounds = array<i64: 16, 128>}, {pipeline_mode = #tpu.pipeline_mode<synchronous>, transform_indices = @transform_4, window_bounds = array<i64: 16, 128>}, {pipeline_mode = #tpu.pipeline_mode<synchronous>, transform_indices = @transform_5, window_bounds = array<i64: 16, 128>}, {transform_indices = @transform_6, window_bounds = array<i64: 16, 128>}, {pipeline_mode = #tpu.pipeline_mode<synchronous>, transform_indices = @transform_7, window_bounds = array<i64: 16, 128>}, {transform_indices = @transform_8, window_bounds = array<i64: 1, 1>}, {transform_indices = @transform_9, window_bounds = array<i64: 1, 1>}]} {
    %c0 = arith.constant 0 : index
    %c0_0 = arith.constant 0 : index
    %0 = vector.load %arg1[%c0, %c0_0] : memref<16x128xf32, #tpu.memory_space<vmem>>, vector<16x128xf32>
    %c0_1 = arith.constant 0 : index
    %c0_2 = arith.constant 0 : index
    %1 = vector.load %arg2[%c0_1, %c0_2] : memref<16x128xf32, #tpu.memory_space<vmem>>, vector<16x128xf32>
    %c0_3 = arith.constant 0 : index
    %c0_4 = arith.constant 0 : index
    %2 = vector.load %arg3[%c0_3, %c0_4] : memref<16x128xf32, #tpu.memory_space<vmem>>, vector<16x128xf32>
    %cst = arith.constant 2.000000e+01 : f32
    %3 = vector.broadcast %cst : f32 to vector<16x128xf32>
    %4 = arith.cmpf ogt, %1, %3 : vector<16x128xf32>
    %cst_5 = arith.constant 2.000000e+01 : f32
    %5 = vector.broadcast %cst_5 : f32 to vector<16x128xf32>
    %6 = arith.minimumf %1, %5 : vector<16x128xf32>
    %7 = math.exp %6 : vector<16x128xf32>
    %8 = math.log1p %7 : vector<16x128xf32>
    %9 = arith.select %4, %1, %8 : vector<16x128xi1>, vector<16x128xf32>
    %cst_6 = arith.constant 9.99999997E-7 : f32
    %10 = vector.broadcast %cst_6 : f32 to vector<16x128xf32>
    %11 = arith.addf %10, %9 : vector<16x128xf32>
    %12 = arith.mulf %11, %2 : vector<16x128xf32>
    %13 = arith.addf %0, %12 : vector<16x128xf32>
    %14 = math.log %11 : vector<16x128xf32>
    %cst_7 = arith.constant -0.918938517 : f32
    %15 = vector.broadcast %cst_7 : f32 to vector<16x128xf32>
    %16 = arith.subf %15, %14 : vector<16x128xf32>
    %cst_8 = arith.constant 5.000000e-01 : f32
    %17 = vector.broadcast %cst_8 : f32 to vector<16x128xf32>
    %18 = arith.mulf %17, %2 : vector<16x128xf32>
    %19 = arith.mulf %18, %2 : vector<16x128xf32>
    %20 = arith.subf %16, %19 : vector<16x128xf32>
    %cst_9 = arith.constant 0.000000e+00 : f32
    %21 = vector.broadcast %cst_9 : f32 to vector<16x128xf32>
    %22 = arith.subf %13, %21 : vector<16x128xf32>
    %cst_10 = arith.constant 1.000000e+01 : f32
    %23 = vector.broadcast %cst_10 : f32 to vector<16x128xf32>
    %24 = arith.mulf %22, %23 : vector<16x128xf32>
    %cst_11 = arith.constant 5.000000e-01 : f32
    %25 = vector.broadcast %cst_11 : f32 to vector<16x128xf32>
    %26 = arith.mulf %25, %24 : vector<16x128xf32>
    %27 = arith.mulf %26, %24 : vector<16x128xf32>
    %cst_12 = arith.constant 1.38364661 : f32
    %28 = vector.broadcast %cst_12 : f32 to vector<16x128xf32>
    %29 = arith.subf %28, %27 : vector<16x128xf32>
    %30 = tpu.iota {dimensions = array<i32: 0>} : vector<16x128xi32>
    %c16_i32 = arith.constant 16 : i32
    %31 = arith.muli %arg0, %c16_i32 : i32
    %32 = vector.broadcast %31 : i32 to vector<16x128xi32>
    %33 = arith.addi %30, %32 : vector<16x128xi32>
    %34 = tpu.iota {dimensions = array<i32: 1>} : vector<16x128xi32>
    %c8_i32 = arith.constant 8 : i32
    %35 = vector.broadcast %c8_i32 : i32 to vector<16x128xi32>
    %36 = arith.cmpi slt, %33, %35 : vector<16x128xi32>
    %c36_i32 = arith.constant 36 : i32
    %37 = vector.broadcast %c36_i32 : i32 to vector<16x128xi32>
    %38 = arith.cmpi slt, %34, %37 : vector<16x128xi32>
    %39 = arith.andi %36, %38 : vector<16x128xi1>
    %cst_13 = arith.constant 0.000000e+00 : f32
    %40 = vector.broadcast %cst_13 : f32 to vector<16x128xf32>
    %41 = arith.select %39, %20, %40 : vector<16x128xi1>, vector<16x128xf32>
    %42 = vector.shape_cast %41 : vector<16x128xf32> to vector<1x16x128xf32>
    %cst_14 = arith.constant dense<0.000000e+00> : vector<1xf32>
    %43 = vector.multi_reduction <add>, %42, %cst_14 [1, 2] : vector<1x16x128xf32> to vector<1xf32>
    %44 = vector.shape_cast %43 : vector<1xf32> to vector<1x1x1xf32>
    %45 = vector.extract %44[0, 0, 0] : f32 from vector<1x1x1xf32>
    %cst_15 = arith.constant 0.000000e+00 : f32
    %46 = vector.broadcast %cst_15 : f32 to vector<16x128xf32>
    %47 = arith.select %39, %29, %46 : vector<16x128xi1>, vector<16x128xf32>
    %48 = vector.shape_cast %47 : vector<16x128xf32> to vector<1x16x128xf32>
    %cst_16 = arith.constant dense<0.000000e+00> : vector<1xf32>
    %49 = vector.multi_reduction <add>, %48, %cst_16 [1, 2] : vector<1x16x128xf32> to vector<1xf32>
    %50 = vector.shape_cast %49 : vector<1xf32> to vector<1x1x1xf32>
    %51 = vector.extract %50[0, 0, 0] : f32 from vector<1x1x1xf32>
    %52 = arith.truncf %13 : vector<16x128xf32> to vector<16x128xbf16>
    %c0_17 = arith.constant 0 : index
    %c0_18 = arith.constant 0 : index
    %53 = vector.load %arg7[%c0_17, %c0_18] : memref<16x128xbf16, #tpu.memory_space<vmem>>, vector<16x128xbf16>
    tpu.vector_store %arg7[%c0_17, %c0_18], %52 {strides = array<i32>} : memref<16x128xbf16, #tpu.memory_space<vmem>>, vector<16x128xbf16>,
    %c0_i32 = arith.constant 0 : i32
    %54 = arith.cmpi eq, %arg0, %c0_i32 : i32
    %55 = arith.extui %54 : i1 to i32
    %c0_i32_19 = arith.constant 0 : i32
    %56 = arith.cmpi ne, %55, %c0_i32_19 : i32
    scf.if %56 {
      %c0_28 = arith.constant 0 : index
      %c0_29 = arith.constant 0 : index
      %63 = vector.load %arg4[%c0_28, %c0_29] : memref<16x128xf32, #tpu.memory_space<vmem>>, vector<16x128xf32>
      %c0_30 = arith.constant 0 : index
      %c0_31 = arith.constant 0 : index
      %64 = vector.load %arg5[%c0_30, %c0_31] : memref<16x128xf32, #tpu.memory_space<vmem>>, vector<16x128xf32>
      %c0_32 = arith.constant 0 : index
      %c0_33 = arith.constant 0 : index
      %65 = vector.load %arg6[%c0_32, %c0_33] : memref<16x128xf32, #tpu.memory_space<vmem>>, vector<16x128xf32>
      %cst_34 = arith.constant 2.000000e+01 : f32
      %66 = vector.broadcast %cst_34 : f32 to vector<16x128xf32>
      %67 = arith.cmpf ogt, %64, %66 : vector<16x128xf32>
      %cst_35 = arith.constant 2.000000e+01 : f32
      %68 = vector.broadcast %cst_35 : f32 to vector<16x128xf32>
      %69 = arith.minimumf %64, %68 : vector<16x128xf32>
      %70 = math.exp %69 : vector<16x128xf32>
      %71 = math.log1p %70 : vector<16x128xf32>
      %72 = arith.select %67, %64, %71 : vector<16x128xi1>, vector<16x128xf32>
      %cst_36 = arith.constant 9.99999997E-7 : f32
      %73 = vector.broadcast %cst_36 : f32 to vector<16x128xf32>
      %74 = arith.addf %73, %72 : vector<16x128xf32>
      %75 = arith.mulf %74, %65 : vector<16x128xf32>
      %76 = arith.addf %63, %75 : vector<16x128xf32>
      %77 = math.log %74 : vector<16x128xf32>
      %cst_37 = arith.constant -0.918938517 : f32
      %78 = vector.broadcast %cst_37 : f32 to vector<16x128xf32>
      %79 = arith.subf %78, %77 : vector<16x128xf32>
      %cst_38 = arith.constant 5.000000e-01 : f32
      %80 = vector.broadcast %cst_38 : f32 to vector<16x128xf32>
      %81 = arith.mulf %80, %65 : vector<16x128xf32>
      %82 = arith.mulf %81, %65 : vector<16x128xf32>
      %83 = arith.subf %79, %82 : vector<16x128xf32>
      %cst_39 = arith.constant 0.000000e+00 : f32
      %84 = vector.broadcast %cst_39 : f32 to vector<16x128xf32>
      %85 = arith.subf %76, %84 : vector<16x128xf32>
      %cst_40 = arith.constant 1.000000e+01 : f32
      %86 = vector.broadcast %cst_40 : f32 to vector<16x128xf32>
      %87 = arith.mulf %85, %86 : vector<16x128xf32>
      %cst_41 = arith.constant 5.000000e-01 : f32
      %88 = vector.broadcast %cst_41 : f32 to vector<16x128xf32>
      %89 = arith.mulf %88, %87 : vector<16x128xf32>
      %90 = arith.mulf %89, %87 : vector<16x128xf32>
      %cst_42 = arith.constant 1.38364661 : f32
      %91 = vector.broadcast %cst_42 : f32 to vector<16x128xf32>
      %92 = arith.subf %91, %90 : vector<16x128xf32>
      %93 = tpu.iota {dimensions = array<i32: 0>} : vector<16x128xi32>
      %94 = tpu.iota {dimensions = array<i32: 1>} : vector<16x128xi32>
      %c8_i32_43 = arith.constant 8 : i32
      %95 = vector.broadcast %c8_i32_43 : i32 to vector<16x128xi32>
      %96 = arith.cmpi slt, %93, %95 : vector<16x128xi32>
      %c0_i32_44 = arith.constant 0 : i32
      %97 = vector.broadcast %c0_i32_44 : i32 to vector<16x128xi32>
      %98 = arith.cmpi eq, %94, %97 : vector<16x128xi32>
      %99 = arith.andi %96, %98 : vector<16x128xi1>
      %cst_45 = arith.constant 0.000000e+00 : f32
      %100 = vector.broadcast %cst_45 : f32 to vector<16x128xf32>
      %101 = arith.select %99, %76, %100 : vector<16x128xi1>, vector<16x128xf32>
      %c0_46 = arith.constant 0 : index
      %c0_47 = arith.constant 0 : index
      %102 = vector.load %arg8[%c0_46, %c0_47] : memref<16x128xf32, #tpu.memory_space<vmem>>, vector<16x128xf32>
      tpu.vector_store %arg8[%c0_46, %c0_47], %101 {strides = array<i32>} : memref<16x128xf32, #tpu.memory_space<vmem>>, vector<16x128xf32>,
      %cst_48 = arith.constant 0.000000e+00 : f32
      %103 = vector.broadcast %cst_48 : f32 to vector<16x128xf32>
      %104 = arith.select %99, %83, %103 : vector<16x128xi1>, vector<16x128xf32>
      %105 = vector.shape_cast %104 : vector<16x128xf32> to vector<1x16x128xf32>
      %cst_49 = arith.constant dense<0.000000e+00> : vector<1xf32>
      %106 = vector.multi_reduction <add>, %105, %cst_49 [1, 2] : vector<1x16x128xf32> to vector<1xf32>
      %107 = vector.shape_cast %106 : vector<1xf32> to vector<1x1x1xf32>
      %108 = vector.extract %107[0, 0, 0] : f32 from vector<1x1x1xf32>
      %c0_50 = arith.constant 0 : index
      %c0_51 = arith.constant 0 : index
      %109 = memref.load %arg9[%c0_50, %c0_51] : memref<1x1xf32, #tpu.memory_space<smem>>
      memref.store %108, %arg9[%c0_50, %c0_51] : memref<1x1xf32, #tpu.memory_space<smem>>
      %cst_52 = arith.constant 0.000000e+00 : f32
      %110 = vector.broadcast %cst_52 : f32 to vector<16x128xf32>
      %111 = arith.select %99, %92, %110 : vector<16x128xi1>, vector<16x128xf32>
      %112 = vector.shape_cast %111 : vector<16x128xf32> to vector<1x16x128xf32>
      %cst_53 = arith.constant dense<0.000000e+00> : vector<1xf32>
      %113 = vector.multi_reduction <add>, %112, %cst_53 [1, 2] : vector<1x16x128xf32> to vector<1xf32>
      %114 = vector.shape_cast %113 : vector<1xf32> to vector<1x1x1xf32>
      %115 = vector.extract %114[0, 0, 0] : f32 from vector<1x1x1xf32>
      %c0_54 = arith.constant 0 : index
      %c0_55 = arith.constant 0 : index
      %116 = memref.load %arg10[%c0_54, %c0_55] : memref<1x1xf32, #tpu.memory_space<smem>>
      memref.store %115, %arg10[%c0_54, %c0_55] : memref<1x1xf32, #tpu.memory_space<smem>>
    } else {
    }
    %c0_20 = arith.constant 0 : index
    %c0_21 = arith.constant 0 : index
    %57 = memref.load %arg9[%c0_20, %c0_21] : memref<1x1xf32, #tpu.memory_space<smem>>
    %58 = arith.addf %57, %45 : f32
    %c0_22 = arith.constant 0 : index
    %c0_23 = arith.constant 0 : index
    %59 = memref.load %arg9[%c0_22, %c0_23] : memref<1x1xf32, #tpu.memory_space<smem>>
    memref.store %58, %arg9[%c0_22, %c0_23] : memref<1x1xf32, #tpu.memory_space<smem>>
    %c0_24 = arith.constant 0 : index
    %c0_25 = arith.constant 0 : index
    %60 = memref.load %arg10[%c0_24, %c0_25] : memref<1x1xf32, #tpu.memory_space<smem>>
    %61 = arith.addf %60, %51 : f32
    %c0_26 = arith.constant 0 : index
    %c0_27 = arith.constant 0 : index
    %62 = memref.load %arg10[%c0_26, %c0_27] : memref<1x1xf32, #tpu.memory_space<smem>>
    memref.store %61, %arg10[%c0_26, %c0_27] : memref<1x1xf32, #tpu.memory_space<smem>>
    return
  }
  func.func @transform_0(%arg0: i32) -> (i32, i32) {
    %c0_i32 = arith.constant 0 : i32
    %c0_i32_0 = arith.constant 0 : i32
    return %arg0, %c0_i32 : i32, i32
  }
  func.func @transform_1(%arg0: i32) -> (i32, i32) {
    %c0_i32 = arith.constant 0 : i32
    %c0_i32_0 = arith.constant 0 : i32
    return %arg0, %c0_i32 : i32, i32
  }
  func.func @transform_2(%arg0: i32) -> (i32, i32) {
    %c0_i32 = arith.constant 0 : i32
    %c0_i32_0 = arith.constant 0 : i32
    return %arg0, %c0_i32 : i32, i32
  }
  func.func @transform_3(%arg0: i32) -> (i32, i32) {
    %c0_i32 = arith.constant 0 : i32
    %c0_i32_0 = arith.constant 0 : i32
    %c0_i32_1 = arith.constant 0 : i32
    return %c0_i32, %c0_i32_0 : i32, i32
  }
  func.func @transform_4(%arg0: i32) -> (i32, i32) {
    %c0_i32 = arith.constant 0 : i32
    %c0_i32_0 = arith.constant 0 : i32
    %c0_i32_1 = arith.constant 0 : i32
    return %c0_i32, %c0_i32_0 : i32, i32
  }
  func.func @transform_5(%arg0: i32) -> (i32, i32) {
    %c0_i32 = arith.constant 0 : i32
    %c0_i32_0 = arith.constant 0 : i32
    %c0_i32_1 = arith.constant 0 : i32
    return %c0_i32, %c0_i32_0 : i32, i32
  }
  func.func @transform_6(%arg0: i32) -> (i32, i32) {
    %c0_i32 = arith.constant 0 : i32
    %c0_i32_0 = arith.constant 0 : i32
    return %arg0, %c0_i32 : i32, i32
  }
  func.func @transform_7(%arg0: i32) -> (i32, i32) {
    %c0_i32 = arith.constant 0 : i32
    %c0_i32_0 = arith.constant 0 : i32
    %c0_i32_1 = arith.constant 0 : i32
    return %c0_i32, %c0_i32_0 : i32, i32
  }
  func.func @transform_8(%arg0: i32) -> (i32, i32) {
    %c0_i32 = arith.constant 0 : i32
    %c0_i32_0 = arith.constant 0 : i32
    %c0_i32_1 = arith.constant 0 : i32
    return %c0_i32, %c0_i32_0 : i32, i32
  }
  func.func @transform_9(%arg0: i32) -> (i32, i32) {
    %c0_i32 = arith.constant 0 : i32
    %c0_i32_0 = arith.constant 0 : i32
    %c0_i32_1 = arith.constant 0 : i32
    return %c0_i32, %c0_i32_0 : i32, i32
  }
}

</mosaic_0001>

<llo_original>
// kernel: bayes_conv_forward.3
$region0: #{bayes_conv_forward.3}
  #allocation0 [shape = 'u32[]', space=smem, size = 0x4, offset = 0x4, fixed_abs, tag = 'smem constant byte address 0x4 - core index']
  #allocation1 [shape = 'u32[144,128]{1,0:T(1,128)}', space=vmem, size = 0x12000, scoped, tag = 'internal scratch']
  %s0 = inlined_call_operand.vmem [shape: bf16[16,128], index: 0, kind: input, shape index: {}]
  %s1 = inlined_call_operand.vmem [shape: bf16[2,128,256], index: 1, kind: input, shape index: {}]
  %s2 = inlined_call_operand.vmem [shape: f32[16,128], index: 2, kind: input, shape index: {}]
  %s3 = inlined_call_operand.vmem [shape: f32[2,16,256], index: 3, kind: output, shape index: {}]
  %s4 = sld [smem:[#allocation0]]
  $region45: #{bayes_conv_forward.3} parent=0
    _
  %s6 = ssub.s32 1, %s4
  %s7 = scalar_select 0, %s6, %s4
  loop: start=0, step=1, limit=4
  $region2: #{bayes_conv_forward.3} parent=0 // loop_pre_header
    _
  $region3: #{bayes_conv_forward.3} parent=0 // loop_header
    %s9 = sphi 0, %s13
    %p10 = scmp.ge.s32.totalorder %s9, 4
    %s16 = sphi 0, %s35
    %s17 = sphi 0, %s31
    %s18 = sphi 0, %s27
    %s19 = sphi 0, %s16
    %s20 = sphi 0, %s17
    %s21 = sphi 0, %s18
    %s22 = sphi 0, %s19
    %s23 = sphi 0, %s20
    %s24 = sphi 0, %s21
    %s38 = sphi 0, %s40
    %s41 = sphi 0, %s38
    %s42 = sphi 0, %s41
    %s58 = sphi 0, %s42
    %s66 = sphi 0, %s68
    %s69 = sphi 0, %s66
    %s70 = sphi 0, %s69
    %s86 = sphi 0, %s70
    %s92 = sphi 0, %s94
    %s95 = sphi 0, %s92
    %s96 = sphi 0, %s95
    %s112 = sphi 0, %s96
    %s122 = sphi 0, %s124
    %s125 = sphi 0, %s122
    %s126 = sphi 0, %s125
    %s142 = sphi 0, %s126
  $region4: #{bayes_conv_forward.3} parent=0 // loop_header_branch
    %12 = sbr.rel (%p10) target = $region8
  $region5: #{bayes_conv_forward.3} parent=0 // loop_body
    %s14 = ssub.s32 %s9, 1
    %s15 = ssub.s32 %s9, 2
    %s25 = sadd.s32 1, %s18
    %p26 = scmp.ge.s32.totalorder %s25, 1
    %s27 = scalar_select %p26, 0, %s25
    %s28 = sadd.s32 1, %s17
    %s29 = scalar_select %p26, %s28, %s17
    %p30 = scmp.ge.s32.totalorder %s29, 1
    %s31 = scalar_select %p30, 0, %s29
    %s32 = sadd.s32 1, %s16
    %s33 = scalar_select %p30, %s32, %s16
    %p34 = scmp.ge.s32.totalorder %s33, 2
    %s35 = scalar_select %p34, 0, %s33
    %s36 = ssub.s32 %s17, %s31
    %p37 = scmp.eq.s32.totalorder %s36, 0
    %s39 = sadd.s32 %s38, 1
    %s40 = scalar_select %p37, %s38, %s39
    %p43 = pneg %p37
    %p44 = scmp.eq.s32.totalorder %s9, 1
    %p45 = por %p43, %p44
    %p46 = scmp.ne.s32.totalorder %s38, %s41
    %p47 = scmp.eq.s32.totalorder %s9, 0
    %p48 = por %p46, %p47
    %p49 = scmp.ne.s32.totalorder %s38, %s41
    %p50 = scmp.eq.s32.totalorder %s14, 1
    %p51 = por %p49, %p50
    %p52 = scmp.ne.s32.totalorder %s41, %s42
    %p53 = scmp.eq.s32.totalorder %s14, 0
    %p54 = por %p52, %p53
    %p55 = scmp.ne.s32.totalorder %s41, %s42
    %p56 = scmp.eq.s32.totalorder %s15, 1
    %p57 = por %p55, %p56
    %p59 = scmp.ne.s32.totalorder %s42, %s58
    %p60 = scmp.eq.s32.totalorder %s15, 0
    %p61 = por %p59, %p60
    %s62 = ssub.s32 %s16, %s35
    %s63 = ssub.s32 %s18, %s27
    %s64 = sor.u32 %s62, %s63
    %p65 = scmp.eq.s32.totalorder %s64, 0
    %s67 = sadd.s32 %s66, 1
    %s68 = scalar_select %p65, %s66, %s67
    %p71 = pneg %p65
    %p72 = scmp.eq.s32.totalorder %s9, 1
    %p73 = por %p71, %p72
    %p74 = scmp.ne.s32.totalorder %s66, %s69
    %p75 = scmp.eq.s32.totalorder %s9, 0
    %p76 = por %p74, %p75
    %p77 = scmp.ne.s32.totalorder %s66, %s69
    %p78 = scmp.eq.s32.totalorder %s14, 1
    %p79 = por %p77, %p78
    %p80 = scmp.ne.s32.totalorder %s69, %s70
    %p81 = scmp.eq.s32.totalorder %s14, 0
    %p82 = por %p80, %p81
    %p83 = scmp.ne.s32.totalorder %s69, %s70
    %p84 = scmp.eq.s32.totalorder %s15, 1
    %p85 = por %p83, %p84
    %p87 = scmp.ne.s32.totalorder %s70, %s86
    %p88 = scmp.eq.s32.totalorder %s15, 0
    %p89 = por %p87, %p88
    %s90 = ssub.s32 %s17, %s31
    %p91 = scmp.eq.s32.totalorder %s90, 0
    %s93 = sadd.s32 %s92, 1
    %s94 = scalar_select %p91, %s92, %s93
    %p97 = pneg %p91
    %p98 = scmp.eq.s32.totalorder %s9, 1
    %p99 = por %p97, %p98
    %p100 = scmp.ne.s32.totalorder %s92, %s95
    %p101 = scmp.eq.s32.totalorder %s9, 0
    %p102 = por %p100, %p101
    %p103 = scmp.ne.s32.totalorder %s92, %s95
    %p104 = scmp.eq.s32.totalorder %s14, 1
    %p105 = por %p103, %p104
    %p106 = scmp.ne.s32.totalorder %s95, %s96
    %p107 = scmp.eq.s32.totalorder %s14, 0
    %p108 = por %p106, %p107
    %p109 = scmp.ne.s32.totalorder %s95, %s96
    %p110 = scmp.eq.s32.totalorder %s15, 1
    %p111 = por %p109, %p110
    %p113 = scmp.ne.s32.totalorder %s96, %s112
    %p114 = scmp.eq.s32.totalorder %s15, 0
    %p115 = por %p113, %p114
    %s116 = ssub.s32 %s16, %s35
    %s117 = ssub.s32 %s17, %s31
    %s118 = sor.u32 %s116, %s117
    %s119 = ssub.s32 %s18, %s27
    %s120 = sor.u32 %s118, %s119
    %p121 = scmp.eq.s32.totalorder %s120, 0
    %s123 = sadd.s32 %s122, 1
    %s124 = scalar_select %p121, %s122, %s123
    %p127 = pneg %p121
    %p128 = scmp.eq.s32.totalorder %s9, 1
    %p129 = por %p127, %p128
    %p130 = scmp.ne.s32.totalorder %s122, %s125
    %p131 = scmp.eq.s32.totalorder %s9, 0
    %p132 = por %p130, %p131
    %p133 = scmp.ne.s32.totalorder %s122, %s125
    %p134 = scmp.eq.s32.totalorder %s14, 1
    %p135 = por %p133, %p134
    %p136 = scmp.ne.s32.totalorder %s125, %s126
    %p137 = scmp.eq.s32.totalorder %s14, 0
    %p138 = por %p136, %p137
    %p139 = scmp.ne.s32.totalorder %s125, %s126
    %p140 = scmp.eq.s32.totalorder %s15, 1
    %p141 = por %p139, %p140
    %p143 = scmp.ne.s32.totalorder %s126, %s142
    %p144 = scmp.eq.s32.totalorder %s15, 0
    %p145 = por %p143, %p144
    %p146 = scmp.le.s32.totalorder 1, %s9
    %p147 = scmp.lt.s32.totalorder %s9, 3
    %p148 = pnand %p146, %p147
    %p149 = pneg %p148
    // Predicated region
    $region9: #{bayes_conv_forward.3} parent=5 // pred_check
      _
    $region10: #{bayes_conv_forward.3} parent=5 // pred_check_branch
      %151 = sbr.rel (%p148) target = $region12
    $region11: #{bayes_conv_forward.3} parent=5 // pred_region
      %s152 = ssub.s32 %s9, 1
      // Predicated region
      $region13: #{bayes_conv_forward.3} parent=11 // pred_check
        %p153 = pneg %p54
      $region14: #{bayes_conv_forward.3} parent=11 // pred_check_branch
        %155 = sbr.rel (%p153) target = $region16
      $region15: #{bayes_conv_forward.3} parent=11 // pred_region
        %s156 = smul.u32 2, %s20
        %p157 = scmp.lt.s32.totalorder %s156, 1
        %s158 = scalar_select %p157, %s156, 1
        %s159 = smul.addr %s158, 4
        %s160 = scalar_lea.vmem %s0, %s159
        %s161 = smul.u32 2, %s20
      $region16: #{bayes_conv_forward.3} parent=11 // pred_fallthru
        _
      // Predicated region
      $region17: #{bayes_conv_forward.3} parent=11 // pred_check
        %p162 = pneg %p108
      $region18: #{bayes_conv_forward.3} parent=11 // pred_check_branch
        %164 = sbr.rel (%p162) target = $region20
      $region19: #{bayes_conv_forward.3} parent=11 // pred_region
        %s165 = smul.u32 2, %s20
        %p166 = scmp.lt.s32.totalorder %s165, 1
        %s167 = scalar_select %p166, %s165, 1
        %s168 = smul.addr %s167, 8
        %s169 = scalar_lea.vmem %s2, %s168
        %s170 = smul.u32 2, %s20
      $region20: #{bayes_conv_forward.3} parent=11 // pred_fallthru
        _
    $region12: #{bayes_conv_forward.3} parent=5 // pred_fallthru
      _
    %p171 = scmp.lt.s32.totalorder %s9, 2
    // Predicated region
    $region21: #{bayes_conv_forward.3} parent=5 // pred_check
      %p172 = pneg %p171
    $region22: #{bayes_conv_forward.3} parent=5 // pred_check_branch
      %174 = sbr.rel (%p172) target = $region24
    $region23: #{bayes_conv_forward.3} parent=5 // pred_region
      // Predicated region
      $region25: #{bayes_conv_forward.3} parent=23 // pred_check
        %p175 = pneg %p76
      $region26: #{bayes_conv_forward.3} parent=23 // pred_check_branch
        %177 = sbr.rel (%p175) target = $region28
      $region27: #{bayes_conv_forward.3} parent=23 // pred_region
        %s178 = smul.u32 2, %s18
        %p179 = scmp.lt.s32.totalorder %s16, 1
        %s180 = scalar_select %p179, %s16, 1
        %p181 = scmp.lt.s32.totalorder %s178, 1
        %s182 = scalar_select %p181, %s178, 1
        %s183 = smul.addr %s180, 32
        %s184 = sadd.s32 %s182, %s183
        %s185 = smul.addr %s184, 4
        %s186 = scalar_lea.vmem %s1, %s185
        %s187 = smul.u32 2, %s18
      $region28: #{bayes_conv_forward.3} parent=23 // pred_fallthru
        _
    $region24: #{bayes_conv_forward.3} parent=5 // pred_fallthru
      _
    %p188 = scmp.le.s32.totalorder 1, %s9
    %p189 = scmp.lt.s32.totalorder %s9, 3
    %p190 = pnand %p188, %p189
    %p191 = pneg %p190
    // Predicated region
    $region29: #{bayes_conv_forward.3} parent=5 // pred_check
      _
    $region30: #{bayes_conv_forward.3} parent=5 // pred_check_branch
      %193 = sbr.rel (%p190) target = $region32
    $region31: #{bayes_conv_forward.3} parent=5 // pred_region
      %s194 = ssub.s32 %s9, 1
      %s195 = smul.u32 2, %s20
      %p196 = scmp.lt.s32.totalorder %s195, 1
      %s197 = scalar_select %p196, %s195, 1
      %s198 = smul.addr %s197, 4
      %s199 = scalar_lea.vmem %s0, %s198
      %p200 = pneg %p54
      %p201 = pneg %p51
      %s202 = smul.u32 2, %s21
      %p203 = scmp.lt.s32.totalorder %s19, 1
      %s204 = scalar_select %p203, %s19, 1
      %p205 = scmp.lt.s32.totalorder %s202, 1
      %s206 = scalar_select %p205, %s202, 1
      %s207 = smul.addr %s204, 32
      %s208 = sadd.s32 %s206, %s207
      %s209 = smul.addr %s208, 4
      %s210 = scalar_lea.vmem %s1, %s209
      %p211 = pneg %p82
      %p212 = pneg %p79
      %s213 = smul.u32 2, %s20
      %p214 = scmp.lt.s32.totalorder %s213, 1
      %s215 = scalar_select %p214, %s213, 1
      %s216 = smul.addr %s215, 8
      %s217 = scalar_lea.vmem %s2, %s216
      %p218 = pneg %p108
      %p219 = pneg %p105
      %p220 = pneg %p138
      %p221 = pneg %p135
      %s222 = smul.u32 2, %s20
      %s223 = smul.u32 2, %s21
      %p224 = scmp.lt.s32.totalorder %s19, 1
      %s225 = scalar_select %p224, %s19, 1
      %p226 = scmp.lt.s32.totalorder %s222, 1
      %s227 = scalar_select %p226, %s222, 1
      %p228 = scmp.lt.s32.totalorder %s223, 1
      %s229 = scalar_select %p228, %s223, 1
      %s230 = smul.addr %s227, 2
      %s231 = sadd.s32 %s229, %s230
      %s232 = smul.addr %s225, 4
      %s233 = sadd.s32 %s231, %s232
      %s234 = smul.addr %s233, 8
      %s235 = scalar_lea.vmem %s3, %s234
      %s236 = smul.u32 2, %s20
      %p237 = scmp.lt.s32.totalorder %s236, 1
      %s238 = scalar_select %p237, %s236, 1
      %s239 = smul.addr %s238, 4
      %s240 = scalar_lea.vmem %s0, %s239
      %s241 = smul.u32 2, %s20
      %s242 = smul.u32 2, %s21
      %p243 = scmp.lt.s32.totalorder %s19, 1
      %s244 = scalar_select %p243, %s19, 1
      %p245 = scmp.lt.s32.totalorder %s242, 1
      %s246 = scalar_select %p245, %s242, 1
      %s247 = smul.addr %s244, 32
      %s248 = sadd.s32 %s246, %s247
      %s249 = smul.addr %s248, 4
      %s250 = scalar_lea.vmem %s1, %s249
      %s251 = smul.u32 2, %s21
      %s252 = smul.u32 2, %s20
      %p253 = scmp.lt.s32.totalorder %s252, 1
      %s254 = scalar_select %p253, %s252, 1
      %s255 = smul.addr %s254, 8
      %s256 = scalar_lea.vmem %s2, %s255
      %s257 = smul.u32 2, %s20
      %s258 = smul.u32 2, %s20
      %s259 = smul.u32 2, %s21
      %p260 = scmp.lt.s32.totalorder %s19, 1
      %s261 = scalar_select %p260, %s19, 1
      %p262 = scmp.lt.s32.totalorder %s258, 1
      %s263 = scalar_select %p262, %s258, 1
      %p264 = scmp.lt.s32.totalorder %s259, 1
      %s265 = scalar_select %p264, %s259, 1
      %s266 = smul.addr %s263, 2
      %s267 = sadd.s32 %s265, %s266
      %s268 = smul.addr %s261, 4
      %s269 = sadd.s32 %s267, %s268
      %s270 = smul.addr %s269, 8
      %s271 = scalar_lea.vmem %s3, %s270
      %s272 = smul.u32 2, %s20
      %s273 = smul.u32 2, %s21
      %v275 = vld [vmem:[%s240] sm:$0xf]
      %v276 = vld [vmem:[%s240 + $0x4] sm:$0xf]
      %v277 = vld [vmem:[%s250] sm:$0xff]
      %v278 = vld [vmem:[%s250 + $0x8] sm:$0xff]
      %v279 = vld [vmem:[%s250 + $0x10] sm:$0xff]
      %v280 = vld [vmem:[%s250 + $0x18] sm:$0xff]
      %v281 = vld [vmem:[%s250 + $0x20] sm:$0xff]
      %v282 = vld [vmem:[%s250 + $0x28] sm:$0xff]
      %v283 = vld [vmem:[%s250 + $0x30] sm:$0xff]
      %v284 = vld [vmem:[%s250 + $0x38] sm:$0xff]
      %v285 = vld [vmem:[%s250 + $0x40] sm:$0xff]
      %v286 = vld [vmem:[%s250 + $0x48] sm:$0xff]
      %v287 = vld [vmem:[%s250 + $0x50] sm:$0xff]
      %v288 = vld [vmem:[%s250 + $0x58] sm:$0xff]
      %v289 = vld [vmem:[%s250 + $0x60] sm:$0xff]
      %v290 = vld [vmem:[%s250 + $0x68] sm:$0xff]
      %v291 = vld [vmem:[%s250 + $0x70] sm:$0xff]
      %v292 = vld [vmem:[%s250 + $0x78] sm:$0xff]
      %v293 = vld [vmem:[%s256] sm:$0xff]
      %v294 = vld [vmem:[%s256 + $0x8] sm:$0xff]
      %296 = vset.pattern.permute.xlu0 0
      %297 = vperm.xlu0 %296, %v293
      %v298 = vpop.permute.xlu0 %297
      %301 = vset.pattern.permute.xlu0 0
      %302 = vperm.xlu0 %301, %v294
      %v303 = vpop.permute.xlu0 %302
      %v307 = vunpack.c.l.b16 %v275
      %v308 = vunpack.c.l.b16 %v276
      %v309 = vpack.c.b16 %v308, %v307
      %v327 = vunpack.c.l.b16 %v277
      %v328 = vunpack.c.h.b16 %v277
      %v329 = vunpack.c.l.b16 %v278
      %v330 = vunpack.c.h.b16 %v278
      %v331 = vunpack.c.l.b16 %v279
      %v332 = vunpack.c.h.b16 %v279
      %v333 = vunpack.c.l.b16 %v280
      %v334 = vunpack.c.h.b16 %v280
      %v335 = vunpack.c.l.b16 %v281
      %v336 = vunpack.c.h.b16 %v281
      %v337 = vunpack.c.l.b16 %v282
      %v338 = vunpack.c.h.b16 %v282
      %v339 = vunpack.c.l.b16 %v283
      %v340 = vunpack.c.h.b16 %v283
      %v341 = vunpack.c.l.b16 %v284
      %v342 = vunpack.c.h.b16 %v284
      %v343 = vunpack.c.l.b16 %v285
      %v344 = vunpack.c.h.b16 %v285
      %v345 = vunpack.c.l.b16 %v286
      %v346 = vunpack.c.h.b16 %v286
      %v347 = vunpack.c.l.b16 %v287
      %v348 = vunpack.c.h.b16 %v287
      %v349 = vunpack.c.l.b16 %v288
      %v350 = vunpack.c.h.b16 %v288
      %v351 = vunpack.c.l.b16 %v289
      %v352 = vunpack.c.h.b16 %v289
      %v353 = vunpack.c.l.b16 %v290
      %v354 = vunpack.c.h.b16 %v290
      %v355 = vunpack.c.l.b16 %v291
      %v356 = vunpack.c.h.b16 %v291
      %v357 = vunpack.c.l.b16 %v292
      %v358 = vunpack.c.h.b16 %v292
      %v359 = vpack.c.b16 %v329, %v327
      %v360 = vpack.c.b16 %v330, %v328
      %v361 = vpack.c.b16 %v333, %v331
      %v362 = vpack.c.b16 %v334, %v332
      %v363 = vpack.c.b16 %v337, %v335
      %v364 = vpack.c.b16 %v338, %v336
      %v365 = vpack.c.b16 %v341, %v339
      %v366 = vpack.c.b16 %v342, %v340
      %v367 = vpack.c.b16 %v345, %v343
      %v368 = vpack.c.b16 %v346, %v344
      %v369 = vpack.c.b16 %v349, %v347
      %v370 = vpack.c.b16 %v350, %v348
      %v371 = vpack.c.b16 %v353, %v351
      %v372 = vpack.c.b16 %v354, %v352
      %v373 = vpack.c.b16 %v357, %v355
      %v374 = vpack.c.b16 %v358, %v356
      %391 = vmatprep.subr.bf16.mxu0 %v360
      %392 = vmatpush1.bf16.msra.mxu0 %v359
      %393 = vmatprep.subr.bf16.mxu0 %v362
      %394 = vmatpush1.bf16.msra.mxu0 %v361
      %395 = vmatprep.subr.bf16.mxu0 %v364
      %396 = vmatpush1.bf16.msra.mxu0 %v363
      %397 = vmatprep.subr.bf16.mxu0 %v366
      %398 = vmatpush1.bf16.msra.mxu0 %v365
      %399 = vmatprep.subr.bf16.mxu0 %v368
      %400 = vmatpush1.bf16.msra.mxu0 %v367
      %401 = vmatprep.subr.bf16.mxu0 %v370
      %402 = vmatpush1.bf16.msra.mxu0 %v369
      %403 = vmatprep.subr.bf16.mxu0 %v372
      %404 = vmatpush1.bf16.msra.mxu0 %v371
      %405 = vmatprep.subr.bf16.mxu0 %v374
      %406 = vmatpush1.bf16.msra.mxu0 %v373
      %407 = vmatprep.subr.bf16.mxu0 0
      %408 = vmatpush1.bf16.msra.mxu0 0
      %409 = vmatprep.subr.bf16.mxu0 0
      %410 = vmatpush1.bf16.msra.mxu0 0
      %411 = vmatprep.subr.bf16.mxu0 0
      %412 = vmatpush1.bf16.msra.mxu0 0
      %413 = vmatprep.subr.bf16.mxu0 0
      %414 = vmatpush1.bf16.msra.mxu0 0
      %415 = vmatprep.subr.bf16.mxu0 0
      %416 = vmatpush1.bf16.msra.mxu0 0
      %417 = vmatprep.subr.bf16.mxu0 0
      %418 = vmatpush1.bf16.msra.mxu0 0
      %419 = vmatprep.subr.bf16.mxu0 0
      %420 = vmatpush1.bf16.msra.mxu0 0
      %421 = vmatprep.subr.bf16.mxu0 0
      %422 = vmatpush1.bf16.msra.mxu0 0
      %423 = vmatprep.mubr.bf16.mxu0 0
      %424 = vmatmul.mubr.bf16.gmra.mrb[0].mxu0 %v309
      %v425 = vpop.f32.mrb[0].mxu0
      %v426 = vadd.f32 %v298, %v425
      %v427 = vpop.f32.mrb[0].mxu0
      %v428 = vadd.f32 %v298, %v427
      %v429 = vpop.f32.mrb[0].mxu0
      %v430 = vadd.f32 %v303, %v429
      %v431 = vpop.f32.mrb[0].mxu0
      %v432 = vadd.f32 %v303, %v431
      %433 = vdwg.mxu0
      %434 = vst [vmem:[%s271] sm:$0xff] %v426
      %435 = vst [vmem:[%s271 + $0x8] sm:$0xff] %v428
      %436 = vst [vmem:[%s271 + $0x10] sm:$0xff] %v430
      %437 = vst [vmem:[%s271 + $0x18] sm:$0xff] %v432
      %s438 = smul.u32 2, %s20
      %s439 = smul.u32 2, %s21
      %p440 = scmp.lt.s32.totalorder %s19, 1
      %s441 = scalar_select %p440, %s19, 1
      %p442 = scmp.lt.s32.totalorder %s438, 1
      %s443 = scalar_select %p442, %s438, 1
      %p444 = scmp.lt.s32.totalorder %s439, 1
      %s445 = scalar_select %p444, %s439, 1
      %s446 = smul.addr %s443, 2
      %s447 = sadd.s32 %s445, %s446
      %s448 = smul.addr %s441, 4
      %s449 = sadd.s32 %s447, %s448
      %s450 = smul.addr %s449, 8
      %s451 = scalar_lea.vmem %s3, %s450
      // Predicated region
      $region33: #{bayes_conv_forward.3} parent=31 // pred_check
        %p452 = pneg %p135
      $region34: #{bayes_conv_forward.3} parent=31 // pred_check_branch
        %454 = sbr.rel (%p452) target = $region36
      $region35: #{bayes_conv_forward.3} parent=31 // pred_region
        %s455 = smul.u32 2, %s20
        %s456 = smul.u32 2, %s21
      $region36: #{bayes_conv_forward.3} parent=31 // pred_fallthru
        _
    $region32: #{bayes_conv_forward.3} parent=5 // pred_fallthru
      _
    %p457 = scmp.le.s32.totalorder 2, %s9
    // Predicated region
    $region37: #{bayes_conv_forward.3} parent=5 // pred_check
      %p458 = pneg %p457
    $region38: #{bayes_conv_forward.3} parent=5 // pred_check_branch
      %460 = sbr.rel (%p458) target = $region40
    $region39: #{bayes_conv_forward.3} parent=5 // pred_region
      %s461 = ssub.s32 %s9, 2
      // Predicated region
      $region41: #{bayes_conv_forward.3} parent=39 // pred_check
        %p462 = pneg %p141
      $region42: #{bayes_conv_forward.3} parent=39 // pred_check_branch
        %464 = sbr.rel (%p462) target = $region44
      $region43: #{bayes_conv_forward.3} parent=39 // pred_region
        %s465 = smul.u32 2, %s23
        %s466 = smul.u32 2, %s24
        %p467 = scmp.lt.s32.totalorder %s22, 1
        %s468 = scalar_select %p467, %s22, 1
        %p469 = scmp.lt.s32.totalorder %s465, 1
        %s470 = scalar_select %p469, %s465, 1
        %p471 = scmp.lt.s32.totalorder %s466, 1
        %s472 = scalar_select %p471, %s466, 1
        %s473 = smul.addr %s470, 2
        %s474 = sadd.s32 %s472, %s473
        %s475 = smul.addr %s468, 4
        %s476 = sadd.s32 %s474, %s475
        %s477 = smul.addr %s476, 8
        %s478 = scalar_lea.vmem %s3, %s477
      $region44: #{bayes_conv_forward.3} parent=39 // pred_fallthru
        _
    $region40: #{bayes_conv_forward.3} parent=5 // pred_fallthru
      _
  $region6: #{bayes_conv_forward.3} parent=0 // loop_footer
    %s13 = sadd.s32 1, %s9
  $region7: #{bayes_conv_forward.3} parent=0 // loop_footer_branch
    %8 = sbr.rel target = $region3
  $region8: #{bayes_conv_forward.3} parent=0 // loop_exit
    _

// kernel: bayes_conv_forward.2
$region0: #{bayes_conv_forward.2}
  #allocation0 [shape = 'u32[]', space=smem, size = 0x4, offset = 0x4, fixed_abs, tag = 'smem constant byte address 0x4 - core index']
  #allocation1 [shape = 'u32[144,128]{1,0:T(1,128)}', space=vmem, size = 0x12000, scoped, tag = 'internal scratch']
  %s0 = inlined_call_operand.vmem [shape: f32[16,128], index: 0, kind: input, shape index: {}]
  %s1 = inlined_call_operand.vmem [shape: f32[16,128], index: 1, kind: input, shape index: {}]
  %s2 = inlined_call_operand.vmem [shape: f32[16,128], index: 2, kind: input, shape index: {}]
  %s3 = inlined_call_operand.vmem [shape: f32[16,128], index: 3, kind: input, shape index: {}]
  %s4 = inlined_call_operand.vmem [shape: f32[16,128], index: 4, kind: input, shape index: {}]
  %s5 = inlined_call_operand.vmem [shape: f32[16,128], index: 5, kind: input, shape index: {}]
  %s6 = inlined_call_operand.vmem [shape: bf16[16,128], index: 6, kind: output, shape index: {0}]
  %s7 = inlined_call_operand.vmem [shape: f32[16,128], index: 7, kind: output, shape index: {1}]
  %s8 = inlined_call_operand.hbm [shape: f32[1,1], index: 8, kind: output, shape index: {2}]
  %s9 = inlined_call_operand.hbm [shape: f32[1,1], index: 9, kind: output, shape index: {3}]
  %10 = xla_tuple %s6, %s7, %s8, %s9
  %s11 = sld [smem:[#allocation0]]
  $region62: #{bayes_conv_forward.2} parent=0
    _
  %s13 = ssub.s32 1, %s11
  %s14 = scalar_select 0, %s13, %s11
  $region1: #{bayes_conv_forward.2} parent=0
    #allocation2 [shape = 'u8[512]{0}', space=smem, size = 0x200, scoped, tag = 'output window, operand 2, single buffered']
    #allocation3 [shape = 's32[1]{0}', space=sflag, size = 0x4, scoped, tag = 'scoped memory for bayes_conv_forward.2']
    #allocation4 [shape = 'u8[512]{0}', space=smem, size = 0x200, scoped, tag = 'output window, operand 3, single buffered']
    #allocation5 [shape = 's32[1]{0}', space=sflag, size = 0x4, scoped, tag = 'scoped memory for bayes_conv_forward.2']
    %15 = vsyncpa [#allocation3], 0
    %16 = vsyncpa [#allocation5], 0
    // Predicated region
    $region2: #{bayes_conv_forward.2} parent=1 // pred_check
      _
    $region3: #{bayes_conv_forward.2} parent=1 // pred_check_branch
      %18 = sbr.rel (0) target = $region5
    $region4: #{bayes_conv_forward.2} parent=1 // pred_region
      _
    $region5: #{bayes_conv_forward.2} parent=1 // pred_fallthru
      _
    // Predicated region
    $region6: #{bayes_conv_forward.2} parent=1 // pred_check
      _
    $region7: #{bayes_conv_forward.2} parent=1 // pred_check_branch
      %20 = sbr.rel (0) target = $region9
    $region8: #{bayes_conv_forward.2} parent=1 // pred_region
      _
    $region9: #{bayes_conv_forward.2} parent=1 // pred_fallthru
      _
    // Predicated region
    $region10: #{bayes_conv_forward.2} parent=1 // pred_check
      _
    $region11: #{bayes_conv_forward.2} parent=1 // pred_check_branch
      %22 = sbr.rel (0) target = $region13
    $region12: #{bayes_conv_forward.2} parent=1 // pred_region
      _
    $region13: #{bayes_conv_forward.2} parent=1 // pred_fallthru
      _
    // Predicated region
    $region14: #{bayes_conv_forward.2} parent=1 // pred_check
      _
    $region15: #{bayes_conv_forward.2} parent=1 // pred_check_branch
      %24 = sbr.rel (0) target = $region17
    $region16: #{bayes_conv_forward.2} parent=1 // pred_region
      _
    $region17: #{bayes_conv_forward.2} parent=1 // pred_fallthru
      _
    // Predicated region
    $region18: #{bayes_conv_forward.2} parent=1 // pred_check
      _
    $region19: #{bayes_conv_forward.2} parent=1 // pred_check_branch
      %26 = sbr.rel (0) target = $region21
    $region20: #{bayes_conv_forward.2} parent=1 // pred_region
      _
    $region21: #{bayes_conv_forward.2} parent=1 // pred_fallthru
      _
    // Predicated region
    $region22: #{bayes_conv_forward.2} parent=1 // pred_check
      _
    $region23: #{bayes_conv_forward.2} parent=1 // pred_check_branch
      %28 = sbr.rel (0) target = $region25
    $region24: #{bayes_conv_forward.2} parent=1 // pred_region
      _
    $region25: #{bayes_conv_forward.2} parent=1 // pred_fallthru
      _
    %v29 = vld [vmem:[%s0] sm:$0xff]
    %v30 = vld [vmem:[%s0 + $0x8] sm:$0xff]
    %v31 = vld [vmem:[%s1] sm:$0xff]
    %v32 = vld [vmem:[%s1 + $0x8] sm:$0xff]
    %v33 = vld [vmem:[%s2] sm:$0xff]
    %v34 = vld [vmem:[%s2 + $0x8] sm:$0xff]
    %vm35 = vcmp.gt.f32.partialorder %v31, 20.0
    %vm36 = vcmp.gt.f32.partialorder %v32, 20.0
    %v37 = vmin.f32 %v31, 20.0
    %v38 = vmin.f32 %v32, 20.0
    %v39 = vmul.f32 %v37, 1.442695
    %v40 = vpow.pop %v39
    %v41 = vmul.f32 %v38, 1.442695
    %v42 = vpow.pop %v41
    %v43 = vadd.f32 %v40, 1.0
    %v44 = vlog2.pop %v43
    %v45 = vmul.f32 %v44, 0.6931472
    %v46 = vmul.f32 -0.5, %v40
    %v47 = vadd.f32 %v46, 1.0
    %v48 = vmul.f32 %v47, %v40
    %v49 = vand.u32 2147483647, %v40
    %vm50 = vcmp.lt.f32.partialorder %v49, 0.0004427343
    %v51 = vsel %vm50, %v48, %v45
    %v52 = vadd.f32 %v42, 1.0
    %v53 = vlog2.pop %v52
    %v54 = vmul.f32 %v53, 0.6931472
    %v55 = vmul.f32 -0.5, %v42
    %v56 = vadd.f32 %v55, 1.0
    %v57 = vmul.f32 %v56, %v42
    %v58 = vand.u32 2147483647, %v42
    %vm59 = vcmp.lt.f32.partialorder %v58, 0.0004427343
    %v60 = vsel %vm59, %v57, %v54
    %v61 = vsel %vm35, %v31, %v51
    %v62 = vsel %vm36, %v32, %v60
    %v63 = vadd.f32 %v61, 1e-06
    %v64 = vadd.f32 %v62, 1e-06
    %v65 = vmul.f32 %v63, %v33
    %v66 = vmul.f32 %v64, %v34
    %v67 = vadd.f32 %v29, %v65
    %v68 = vadd.f32 %v30, %v66
    %v69 = vlog2.pop %v63
    %v70 = vmul.f32 %v69, 0.6931472
    %v71 = vlog2.pop %v64
    %v72 = vmul.f32 %v71, 0.6931472
    %v73 = vsub.f32 -0.9189385, %v70
    %v74 = vsub.f32 -0.9189385, %v72
    %v75 = vmul.f32 %v33, 0.5
    %v76 = vmul.f32 %v34, 0.5
    %v77 = vmul.f32 %v75, %v33
    %v78 = vmul.f32 %v76, %v34
    %v79 = vsub.f32 %v73, %v77
    %v80 = vsub.f32 %v74, %v78
    %v81 = vmul.f32 %v67, 10.0
    %v82 = vmul.f32 %v68, 10.0
    %v83 = vmul.f32 %v81, 0.5
    %v84 = vmul.f32 %v82, 0.5
    %v85 = vmul.f32 %v83, %v81
    %v86 = vmul.f32 %v84, %v82
    %v87 = vsub.f32 1.3836466, %v85
    %v88 = vsub.f32 1.3836466, %v86
    %v89 = vlaneseq
    %v90 = vshrl.u32 %v89, 7
    %v91 = vadd.s32 %v90, 8
    %s92 = smul.u32 0, 16
    %v93 = vstv %s92
    %v94 = vadd.s32 %v90, %v93
    %v95 = vadd.s32 %v91, %v93
    %v96 = vlaneseq
    %v97 = vand.u32 %v96, 127
    %vm98 = vcmp.lt.s32.totalorder %v94, 8
    %vm99 = vcmp.lt.s32.totalorder %v95, 8
    %vm100 = vcmp.lt.s32.totalorder %v97, 36
    %vm101 = vmand %vm98, %vm100
    %vm102 = vmand %vm99, %vm100
    %v103 = vsel %vm101, %v79, 0.0
    %v104 = vsel %vm102, %v80, 0.0
    %v105 = vadd.f32 %v103, %v104
    %106 = vadd.xlane.f32.xlu0 %v105
    %v107 = vpop.xlane.xlu0 %106
    %v108 = vrot.slane %v107, 4
    %v109 = vadd.f32 %v107, %v108
    %v110 = vrot.slane %v109, 2
    %v111 = vadd.f32 %v109, %v110
    %v112 = vrot.slane %v111, 1
    %v113 = vadd.f32 %v111, %v112
    %s114 = vtos %v113
    %v115 = vsel %vm101, %v87, 0.0
    %v116 = vsel %vm102, %v88, 0.0
    %v117 = vadd.f32 %v115, %v116
    %118 = vadd.xlane.f32.xlu0 %v117
    %v119 = vpop.xlane.xlu0 %118
    %v120 = vrot.slane %v119, 4
    %v121 = vadd.f32 %v119, %v120
    %v122 = vrot.slane %v121, 2
    %v123 = vadd.f32 %v121, %v122
    %v124 = vrot.slane %v123, 1
    %v125 = vadd.f32 %v123, %v124
    %s126 = vtos %v125
    %v127 = vpack.c.bf16 %v68, %v67
    %v129 = vunpack.c.l.b16 %v127
    %v130 = vunpack.c.h.b16 %v127
    %v131 = vpack.c.b16 %v129, %v129
    %v132 = vpack.c.b16 %v130, %v130
    %135 = vst [vmem:[%s6] sm:$0xf] %v131
    %136 = vst [vmem:[%s6 + $0x4] sm:$0xf] %v132
    %p137 = scmp.eq.s32.totalorder 0, 0
    // Predicated region
    $region26: #{bayes_conv_forward.2} parent=1 // pred_check
      %p138 = pneg %p137
    $region27: #{bayes_conv_forward.2} parent=1 // pred_check_branch
      %140 = sbr.rel (%p138) target = $region29
    $region28: #{bayes_conv_forward.2} parent=1 // pred_region
      %v141 = vld [vmem:[%s3] sm:$0xff]
      %v142 = vld [vmem:[%s3 + $0x8] sm:$0xff]
      %v143 = vld [vmem:[%s4] sm:$0xff]
      %v144 = vld [vmem:[%s4 + $0x8] sm:$0xff]
      %v145 = vld [vmem:[%s5] sm:$0xff]
      %v146 = vld [vmem:[%s5 + $0x8] sm:$0xff]
      %vm147 = vcmp.gt.f32.partialorder %v143, 20.0
      %vm148 = vcmp.gt.f32.partialorder %v144, 20.0
      %v149 = vmin.f32 %v143, 20.0
      %v150 = vmin.f32 %v144, 20.0
      %v151 = vmul.f32 %v149, 1.442695
      %v152 = vpow.pop %v151
      %v153 = vmul.f32 %v150, 1.442695
      %v154 = vpow.pop %v153
      %v155 = vadd.f32 %v152, 1.0
      %v156 = vlog2.pop %v155
      %v157 = vmul.f32 %v156, 0.6931472
      %v158 = vmul.f32 -0.5, %v152
      %v159 = vadd.f32 %v158, 1.0
      %v160 = vmul.f32 %v159, %v152
      %v161 = vand.u32 2147483647, %v152
      %vm162 = vcmp.lt.f32.partialorder %v161, 0.0004427343
      %v163 = vsel %vm162, %v160, %v157
      %v164 = vadd.f32 %v154, 1.0
      %v165 = vlog2.pop %v164
      %v166 = vmul.f32 %v165, 0.6931472
      %v167 = vmul.f32 -0.5, %v154
      %v168 = vadd.f32 %v167, 1.0
      %v169 = vmul.f32 %v168, %v154
      %v170 = vand.u32 2147483647, %v154
      %vm171 = vcmp.lt.f32.partialorder %v170, 0.0004427343
      %v172 = vsel %vm171, %v169, %v166
      %v173 = vsel %vm147, %v143, %v163
      %v174 = vsel %vm148, %v144, %v172
      %v175 = vadd.f32 %v173, 1e-06
      %v176 = vadd.f32 %v174, 1e-06
      %v177 = vmul.f32 %v175, %v145
      %v178 = vmul.f32 %v176, %v146
      %v179 = vadd.f32 %v141, %v177
      %v180 = vadd.f32 %v142, %v178
      %v181 = vlog2.pop %v175
      %v182 = vmul.f32 %v181, 0.6931472
      %v183 = vlog2.pop %v176
      %v184 = vmul.f32 %v183, 0.6931472
      %v185 = vsub.f32 -0.9189385, %v182
      %v186 = vsub.f32 -0.9189385, %v184
      %v187 = vmul.f32 %v145, 0.5
      %v188 = vmul.f32 %v146, 0.5
      %v189 = vmul.f32 %v187, %v145
      %v190 = vmul.f32 %v188, %v146
      %v191 = vsub.f32 %v185, %v189
      %v192 = vsub.f32 %v186, %v190
      %v193 = vmul.f32 %v179, 10.0
      %v194 = vmul.f32 %v180, 10.0
      %v195 = vmul.f32 %v193, 0.5
      %v196 = vmul.f32 %v194, 0.5
      %v197 = vmul.f32 %v195, %v193
      %v198 = vmul.f32 %v196, %v194
      %v199 = vsub.f32 1.3836466, %v197
      %v200 = vsub.f32 1.3836466, %v198
      %vm201 = vcmp.lt.s32.totalorder %v90, 8
      %vm202 = vcmp.lt.s32.totalorder %v91, 8
      %vm203 = vcmp.eq.s32.totalorder %v97, 0
      %vm204 = vmand %vm201, %vm203
      %vm205 = vmand %vm202, %vm203
      %v206 = vsel %vm204, %v179, 0.0
      %v207 = vsel %vm205, %v180, 0.0
      %208 = vst [vmem:[%s7] sm:$0xff] %v206
      %209 = vst [vmem:[%s7 + $0x8] sm:$0xff] %v207
      %v210 = vsel %vm204, %v191, 0.0
      %v211 = vsel %vm205, %v192, 0.0
      %v212 = vadd.f32 %v210, %v211
      %213 = vadd.xlane.f32.xlu0 %v212
      %v214 = vpop.xlane.xlu0 %213
      %v215 = vrot.slane %v214, 4
      %v216 = vadd.f32 %v214, %v215
      %v217 = vrot.slane %v216, 2
      %v218 = vadd.f32 %v216, %v217
      %v219 = vrot.slane %v218, 1
      %v220 = vadd.f32 %v218, %v219
      %s221 = vtos %v220
      %s222 = scalar_lea.smem [#allocation2], 0
      %223 = sst [smem:[%s222]] %s221
      %v224 = vsel %vm204, %v199, 0.0
      %v225 = vsel %vm205, %v200, 0.0
      %v226 = vadd.f32 %v224, %v225
      %227 = vadd.xlane.f32.xlu0 %v226
      %v228 = vpop.xlane.xlu0 %227
      %v229 = vrot.slane %v228, 4
      %v230 = vadd.f32 %v228, %v229
      %v231 = vrot.slane %v230, 2
      %v232 = vadd.f32 %v230, %v231
      %v233 = vrot.slane %v232, 1
      %v234 = vadd.f32 %v232, %v233
      %s235 = vtos %v234
      %s236 = scalar_lea.smem [#allocation4], 0
      %237 = sst [smem:[%s236]] %s235
    $region29: #{bayes_conv_forward.2} parent=1 // pred_fallthru
      _
    %s238 = sld [smem:[#allocation2]]
    %s239 = sadd.f32 %s238, %s114
    %s240 = scalar_lea.smem [#allocation2], 0
    %241 = sst [smem:[%s240]] %s239
    %s242 = sld [smem:[#allocation4]]
    %s243 = sadd.f32 %s242, %s126
    %s244 = scalar_lea.smem [#allocation4], 0
    %245 = sst [smem:[%s244]] %s243
    // Predicated region
    $region30: #{bayes_conv_forward.2} parent=1 // pred_check
      _
    $region31: #{bayes_conv_forward.2} parent=1 // pred_check_branch
      %247 = sbr.rel (0) target = $region33
    $region32: #{bayes_conv_forward.2} parent=1 // pred_region
      _
    $region33: #{bayes_conv_forward.2} parent=1 // pred_fallthru
      _
    // Predicated region
    $region34: #{bayes_conv_forward.2} parent=1 // pred_check
      _
    $region35: #{bayes_conv_forward.2} parent=1 // pred_check_branch
      %249 = sbr.rel (0) target = $region37
    $region36: #{bayes_conv_forward.2} parent=1 // pred_region
      _
    $region37: #{bayes_conv_forward.2} parent=1 // pred_fallthru
      _
    // Predicated region
    $region38: #{bayes_conv_forward.2} parent=1 // pred_check
      _
    $region39: #{bayes_conv_forward.2} parent=1 // pred_check_branch
      %251 = sbr.rel (0) target = $region41
    $region40: #{bayes_conv_forward.2} parent=1 // pred_region
      %s253 = ssub.s32 16, 16
      %254 = vsyncadd [#allocation3], %s253
      %257 = dma.smem_to_hbm [#allocation2], 16, %s8, [#allocation3]
    $region41: #{bayes_conv_forward.2} parent=1 // pred_fallthru
      _
    // Predicated region
    $region42: #{bayes_conv_forward.2} parent=1 // pred_check
      _
    $region43: #{bayes_conv_forward.2} parent=1 // pred_check_branch
      %259 = sbr.rel (0) target = $region45
    $region44: #{bayes_conv_forward.2} parent=1 // pred_region
      %s261 = ssub.s32 16, 16
      %262 = vsyncadd [#allocation5], %s261
      %265 = dma.smem_to_hbm [#allocation4], 16, %s9, [#allocation5]
    $region45: #{bayes_conv_forward.2} parent=1 // pred_fallthru
      _
    // Predicated region
    $region46: #{bayes_conv_forward.2} parent=1 // pred_check
      _
    $region47: #{bayes_conv_forward.2} parent=1 // pred_check_branch
      %267 = sbr.rel (0) target = $region49
    $region48: #{bayes_conv_forward.2} parent=1 // pred_region
      _
    $region49: #{bayes_conv_forward.2} parent=1 // pred_fallthru
      _
    // Predicated region
    $region50: #{bayes_conv_forward.2} parent=1 // pred_check
      _
    $region51: #{bayes_conv_forward.2} parent=1 // pred_check_branch
      %269 = sbr.rel (0) target = $region53
    $region52: #{bayes_conv_forward.2} parent=1 // pred_region
      _
    $region53: #{bayes_conv_forward.2} parent=1 // pred_fallthru
      _
    // Predicated region
    $region54: #{bayes_conv_forward.2} parent=1 // pred_check
      _
    $region55: #{bayes_conv_forward.2} parent=1 // pred_check_branch
      %271 = sbr.rel (0) target = $region57
    $region56: #{bayes_conv_forward.2} parent=1 // pred_region
      %272 = dma.done [#allocation3], 16
    $region57: #{bayes_conv_forward.2} parent=1 // pred_fallthru
      _
    // Predicated region
    $region58: #{bayes_conv_forward.2} parent=1 // pred_check
      _
    $region59: #{bayes_conv_forward.2} parent=1 // pred_check_branch
      %274 = sbr.rel (0) target = $region61
    $region60: #{bayes_conv_forward.2} parent=1 // pred_region
      %275 = dma.done [#allocation5], 16
    $region61: #{bayes_conv_forward.2} parent=1 // pred_fallthru
      _
    %276 = sfence
    %277 = vsyncpa [#allocation3], 1
    %278 = vsyncpa [#allocation5], 1

</llo_original>
